<compile_context>
chip_gen: v6e
topology: v6e:2x2x1
jax: 0.10.0
libtpu: 0.0.40
codegen_flags: <defaults>
</compile_context>

<pallas_src>
import functools

import jax
import jax.numpy as jnp
from jax.experimental import pallas as pl
from jax.experimental.pallas import tpu as pltpu


def _round_up(x, m):
    return ((x + m - 1) // m) * m


def _largest_tile(dim, max_tile, quantum):
    """Largest divisor of `dim` that is a multiple of `quantum` and <= max_tile."""
    if dim <= max_tile:
        return dim
    t = (max_tile // quantum) * quantum
    while t >= quantum:
        if dim % t == 0:
            return t
        t -= quantum
    return dim  # fallback: untiled (vmem_need is computed from the actual choice)


def _vmem_capacity_bytes():
    try:
        return int(pltpu.get_tpu_info().vmem_capacity_bytes)
    except Exception:
        return 64 * 1024 * 1024  # conservative default (v7x per-core VMEM)


def choose_i_tile(I, H, compute_dtype=jnp.bfloat16):
    """Pick the intermediate-dim tile from the chip's VMEM budget.

    Double-buffered weight blocks cost ~6*H*it*itemsize bytes; spend ~40% of VMEM on
    them (it=512-ish on v7x/64MiB, 1024-2048 on v5e/v6e/128MiB for H<=4096)."""
    cd = jnp.dtype(compute_dtype).itemsize
    budget = int(0.4 * _vmem_capacity_bytes())
    it_max = budget // (6 * H * cd)
    it_max = max(128, min(2048, (it_max // 128) * 128))
    return _largest_tile(I, it_max, 128)


def prepare_moe_weights(w_gate, w_up, w_down, *, i_tile, compute_dtype=jnp.bfloat16):
    """One-time (load-time) weight layout prep.  Do NOT call per forward pass.

    w_gate/w_up: (E, I, H); w_down: (E, H, I)   (PyTorch nn.Linear [out, in] layout)
    Returns:
      w_gu: (E, H, 2*I) compute_dtype, columns [2*i_tile*i : 2*i_tile*(i+1)] hold
            [gate tile i | up tile i]  (so one MXU dot per I-tile serves both).
      w_d : (E, I, H)   compute_dtype (down weights pre-transposed).
    """
    E, I, H = w_gate.shape
    assert w_up.shape == (E, I, H) and w_down.shape == (E, H, I)
    assert I % i_tile == 0, (I, i_tile)
    nI = I // i_tile
    wg_t = jnp.swapaxes(w_gate, 1, 2).reshape(E, H, nI, i_tile)
    wu_t = jnp.swapaxes(w_up, 1, 2).reshape(E, H, nI, i_tile)
    w_gu = jnp.concatenate([wg_t, wu_t], axis=3).reshape(E, H, 2 * I).astype(compute_dtype)
    w_d = jnp.swapaxes(w_down, 1, 2).astype(compute_dtype)  # (E, I, H)
    return w_gu, w_d


def _moe_kernel(eid_ref, nvalid_ref, x_ref, rw_ref, wgu_ref, wd_ref, o_ref, acc_ref,
                *, i_tile):
    t = pl.program_id(0)   # token-group tile (parallel)
    i = pl.program_id(1)   # intermediate-dim tile (reduction)

    @pl.when(t < nvalid_ref[0])          # skip compute on pure-padding tiles
    def _():
        @pl.when(i == 0)
        def _():
            acc_ref[...] = jnp.zeros_like(acc_ref)

        x = x_ref[...]                                                   # (tt, H)  bf16
        gu = jnp.dot(x, wgu_ref[...],
                     preferred_element_type=jnp.float32)                 # (tt, 2it) f32
        g = gu[:, :i_tile]
        u = gu[:, i_tile:]
        h = (g * jax.nn.sigmoid(g)) * u                                  # SwiGLU, f32
        h = h * rw_ref[...]                                              # routing weight
        acc_ref[...] += jnp.dot(h.astype(x.dtype), wd_ref[...],
                                preferred_element_type=jnp.float32)      # (tt, H) f32

        @pl.when(i == pl.num_programs(1) - 1)
        def _():
            o_ref[...] = acc_ref[...]


@functools.partial(
    jax.jit,
    static_argnames=("topk", "renormalize", "i_tile", "t_tile", "compute_dtype"),
)
def sparse_moe_forward(x, gating_output, w_gu, w_d, *, topk, renormalize, i_tile,
                       t_tile=None, compute_dtype=jnp.bfloat16):
    """x: (T, H); gating_output: (T, E); w_gu/w_d from prepare_moe_weights(i_tile=...)."""
    T, H = x.shape
    E = gating_output.shape[-1]
    E_w, H_w, I2 = w_gu.shape
    I = I2 // 2
    assert E_w == E and H_w == H and w_d.shape == (E, I, H)
    assert topk <= E
    it = i_tile
    assert I % it == 0
    nI = I // it

    # ---------------- routing (tiny, plain JAX glue) ----------------
    probs = jax.nn.softmax(gating_output.astype(jnp.float32), axis=-1)   # (T, E)
    topk_vals, topk_idx = jax.lax.top_k(probs, topk)                     # (T, k)
    if renormalize:
        topk_vals = topk_vals / jnp.sum(topk_vals, axis=-1, keepdims=True)

    N = T * topk
    A = min(E, N)                        # static upper bound on active experts

    # ---------------- token tiling ----------------
    if t_tile is None:
        avg = -(-N // A)                 # avg assignments per active expert (ceil)
        tt = max(16, min(256, _round_up(avg, 16)))
    else:
        tt = t_tile
    assert tt % 8 == 0

    P = _round_up(N + A * (tt - 1), tt)  # static bound on the padded/grouped buffer
    num_tiles = P // tt

    # ---------------- group tokens by expert (wrapper glue) ----------------
    expert_flat = topk_idx.reshape(N).astype(jnp.int32)
    token_flat = (jnp.arange(N, dtype=jnp.int32) // topk).astype(jnp.int32)
    w_flat = topk_vals.reshape(N).astype(jnp.float32)

    order = jnp.argsort(expert_flat)                       # stable, groups by expert
    sorted_e = expert_flat[order]
    sorted_t = token_flat[order]
    sorted_w = w_flat[order]

    counts = jnp.bincount(expert_flat, length=E)           # (E,)
    tiles_per_e = (counts + tt - 1) // tt
    padded_counts = tiles_per_e * tt
    group_start = jnp.cumsum(counts) - counts              # exclusive cumsum
    padded_start = jnp.cumsum(padded_counts) - padded_counts
    nvalid_tiles = jnp.sum(tiles_per_e).astype(jnp.int32)

    rank = jnp.arange(N, dtype=jnp.int32) - group_start[sorted_e]
    dest_row = (padded_start[sorted_e] + rank).astype(jnp.int32)   # (N,) unique rows

    x_c = x.astype(compute_dtype)
    x_sorted = jnp.zeros((P, H), compute_dtype).at[dest_row].set(x_c[sorted_t])
    rw_sorted = jnp.zeros((P, 1), jnp.float32).at[dest_row, 0].set(sorted_w)
    dest_tok = jnp.full((P,), T, jnp.int32).at[dest_row].set(sorted_t)
    row_eid = jnp.zeros((P,), jnp.int32).at[dest_row].set(sorted_e)
    tile_eid = row_eid.reshape(num_tiles, tt)[:, 0]         # first row of a valid tile is real
    nvalid_arr = jnp.reshape(nvalid_tiles, (1,))

    # ---------------- VMEM budget / compiler params ----------------
    cd = jnp.dtype(compute_dtype).itemsize
    vmem_need = (
        2 * tt * H * cd              # x tile (double-buffered)
        + 2 * H * (2 * it) * cd      # fused gate/up weight tile
        + 2 * it * H * cd            # down weight tile
        + 2 * tt * 128 * 4           # routing-weight tile (lane-padded)
        + 2 * tt * H * 4             # f32 output tile
        + tt * H * 4                 # f32 accumulator scratch
    )
    ckw = dict(dimension_semantics=("parallel", "arbitrary"))
    if vmem_need > 12 * (2 ** 20):
        cap = int(0.8 * _vmem_capacity_bytes())            # never the whole chip's VMEM
        ckw["vmem_limit_bytes"] = int(min(cap, max(int(vmem_need * 1.3), 16 * (2 ** 20))))

    cost = pl.CostEstimate(
        flops=int(6 * N * H * I),
        transcendentals=int(N * I),
        bytes_accessed=int(A * 3 * H * I * cd + P * H * (cd + 4) + T * H * 8),
    )

    y_padded = pl.pallas_call(
        functools.partial(_moe_kernel, i_tile=it),
        out_shape=jax.ShapeDtypeStruct((P, H), jnp.float32),
        grid_spec=pltpu.PrefetchScalarGridSpec(
            num_scalar_prefetch=2,
            grid=(num_tiles, nI),
            in_specs=[
                # grouped activations: resident across the I axis
                pl.BlockSpec((tt, H), lambda t, i, eid, nv: (t, 0)),
                # per-row routing weights (zero on padded rows)
                pl.BlockSpec((tt, 1), lambda t, i, eid, nv: (t, 0)),
                # fused gate/up weights, gathered by this tile's expert id
                pl.BlockSpec((None, H, 2 * it), lambda t, i, eid, nv: (eid[t], 0, i)),
                # down weights (pre-transposed), gathered by expert id
                pl.BlockSpec((None, it, H), lambda t, i, eid, nv: (eid[t], i, 0)),
            ],
            out_specs=pl.BlockSpec((tt, H), lambda t, i, eid, nv: (t, 0)),
            scratch_shapes=[pltpu.VMEM((tt, H), jnp.float32)],
        ),
        compiler_params=pltpu.CompilerParams(**ckw),
        cost_estimate=cost,
    )(tile_eid, nvalid_arr, x_sorted, rw_sorted, w_gu, w_d)

    # un-permute: scatter-add each grouped row back to its token (padding rows -> row T).
    out = jnp.zeros((T + 1, H), jnp.float32).at[dest_tok].add(y_padded)
    return out[:T].astype(x.dtype)


def _reference(x, gating_output, w_gate, w_up, w_down, *, topk, renormalize,
               compute_dtype=jnp.bfloat16):
    """Pure-JAX reference matching the kernel's bf16-input / f32-accumulate math."""
    probs = jax.nn.softmax(gating_output.astype(jnp.float32), axis=-1)
    topk_vals, topk_idx = jax.lax.top_k(probs, topk)
    if renormalize:
        topk_vals = topk_vals / jnp.sum(topk_vals, axis=-1, keepdims=True)
    xc = x.astype(compute_dtype)
    wg_c = w_gate.astype(compute_dtype)
    wu_c = w_up.astype(compute_dtype)
    wd_c = w_down.astype(compute_dtype)
    out = jnp.zeros(x.shape, jnp.float32)
    for k in range(topk):
        wg = wg_c[topk_idx[:, k]]   # (T, I, H)
        wu = wu_c[topk_idx[:, k]]
        wd = wd_c[topk_idx[:, k]]   # (T, H, I)
        g = jnp.einsum("th,tih->ti", xc, wg, preferred_element_type=jnp.float32)
        u = jnp.einsum("th,tih->ti", xc, wu, preferred_element_type=jnp.float32)
        h = (g * jax.nn.sigmoid(g)) * u
        y = jnp.einsum("ti,thi->th", h.astype(compute_dtype), wd,
                       preferred_element_type=jnp.float32)
        out = out + topk_vals[:, k:k + 1] * y
    return out.astype(x.dtype)


if __name__ == "__main__":
    # Small shapes consistent with the module's forward:
    #   x: [num_tokens, hidden], gating_output: [num_tokens, n_experts].
    # E > T*topk exercises the active-expert grouping/padding path,
    # i_tile=128 < I exercises the intermediate-dim tiling path.
    T, H, I = 4, 128, 256
    E, TOPK = 16, 2
    RENORMALIZE = True
    I_TILE = 128  # at production sizes, choose_i_tile(I, H) derives this from VMEM

    key = jax.random.PRNGKey(0)
    kx, kg, kwg, kwu, kwd = jax.random.split(key, 5)

    x = jax.random.normal(kx, (T, H), dtype=jnp.float32)
    gating_output = jax.random.normal(kg, (T, E), dtype=jnp.float32)

    # Expert weights in PyTorch nn.Linear [out, in] layout.
    w_gate = jax.random.normal(kwg, (E, I, H), dtype=jnp.float32) * 0.05
    w_up = jax.random.normal(kwu, (E, I, H), dtype=jnp.float32) * 0.05
    w_down = jax.random.normal(kwd, (E, H, I), dtype=jnp.float32) * 0.05

    # One-time (load-time) weight layout prep, outside the per-call forward.
    w_gu, w_d = prepare_moe_weights(w_gate, w_up, w_down, i_tile=I_TILE)
    w_gu, w_d = jax.block_until_ready((w_gu, w_d))

    out = sparse_moe_forward(
        x, gating_output, w_gu, w_d,
        topk=TOPK, renormalize=RENORMALIZE, i_tile=I_TILE,
    )
    out = jax.block_until_ready(out)

    ref = _reference(
        x, gating_output, w_gate, w_up, w_down, topk=TOPK, renormalize=RENORMALIZE
    )
    assert out.shape == (T, H) and out.dtype == x.dtype
    max_err = float(jnp.max(jnp.abs(out - ref)))
    assert jnp.allclose(out, ref, atol=1e-2, rtol=1e-2), max_err

    print("KERNEL_OK")
</pallas_src>

<mosaic_0001>
module attributes {stable_mosaic.version = 11 : i64} {
  func.func private @main(%arg0: i32) attributes {dimension_semantics = [#tpu.dimension_semantics<core_parallel>], iteration_bounds = array<i64: 2>, tpu.core_type = #tpu.core_type<sc_scalar_subcore>, window_params = []} {
    return
  }
}

module attributes {stable_mosaic.version = 11 : i64} {
  func.func private @main(%arg0: i32) attributes {dimension_semantics = [#tpu.dimension_semantics<core_parallel>], iteration_bounds = array<i64: 2>, tpu.core_type = #tpu.core_type<sc_scalar_subcore>, window_params = []} {
    return
  }
}

module attributes {stable_mosaic.version = 11 : i64} {
  func.func @_moe_kernel(%arg0: i32, %arg1: i32, %arg2: memref<8xi32, #tpu.memory_space<smem>>, %arg3: memref<1xi32, #tpu.memory_space<smem>>, %arg4: memref<16x128xbf16, #tpu.memory_space<vmem>>, %arg5: memref<16x1xf32, #tpu.memory_space<vmem>>, %arg6: memref<1x128x256xbf16, #tpu.memory_space<vmem>>, %arg7: memref<1x128x128xbf16, #tpu.memory_space<vmem>>, %arg8: memref<16x128xf32, #tpu.memory_space<vmem>>, %arg9: memref<16x128xf32, #tpu.memory_space<vmem>>) attributes {dimension_semantics = [#tpu.dimension_semantics<parallel>, #tpu.dimension_semantics<arbitrary>], iteration_bounds = array<i64: 8, 2>, scalar_prefetch = 2 : i64, scratch_operands = 1 : i64, tpu.core_type = #tpu.core_type<tc>, window_params = [{transform_indices = @transform_0, window_bounds = array<i64: 16, 128>}, {transform_indices = @transform_1, window_bounds = array<i64: 16, 1>}, {transform_indices = @transform_2, window_bounds = array<i64: 1, 128, 256>}, {transform_indices = @transform_3, window_bounds = array<i64: 1, 128, 128>}, {transform_indices = @transform_4, window_bounds = array<i64: 16, 128>}]} {
    %c0 = arith.constant 0 : index
    %0 = memref.load %arg3[%c0] : memref<1xi32, #tpu.memory_space<smem>>
    %1 = arith.cmpi slt, %arg0, %0 : i32
    %2 = arith.extui %1 : i1 to i32
    %c0_i32 = arith.constant 0 : i32
    %3 = arith.cmpi ne, %2, %c0_i32 : i32
    scf.if %3 {
      %c0_i32_0 = arith.constant 0 : i32
      %4 = arith.cmpi eq, %arg1, %c0_i32_0 : i32
      %5 = arith.extui %4 : i1 to i32
      %c0_i32_1 = arith.constant 0 : i32
      %6 = arith.cmpi ne, %5, %c0_i32_1 : i32
      scf.if %6 {
        %cst_19 = arith.constant 0.000000e+00 : f32
        %33 = vector.broadcast %cst_19 : f32 to vector<16x128xf32>
        %c0_20 = arith.constant 0 : index
        %c0_21 = arith.constant 0 : index
        %34 = vector.load %arg9[%c0_20, %c0_21] : memref<16x128xf32, #tpu.memory_space<vmem>>, vector<16x128xf32>
        tpu.vector_store %arg9[%c0_20, %c0_21], %33 {strides = array<i32>} : memref<16x128xf32, #tpu.memory_space<vmem>>, vector<16x128xf32>,
      } else {
      }
      %c0_2 = arith.constant 0 : index
      %c0_3 = arith.constant 0 : index
      %7 = vector.load %arg4[%c0_2, %c0_3] : memref<16x128xbf16, #tpu.memory_space<vmem>>, vector<16x128xbf16>
      %c0_4 = arith.constant 0 : index
      %c0_5 = arith.constant 0 : index
      %c0_6 = arith.constant 0 : index
      %8 = vector.load %arg6[%c0_4, %c0_5, %c0_6] : memref<1x128x256xbf16, #tpu.memory_space<vmem>>, vector<1x128x256xbf16>
      %9 = vector.shape_cast %8 : vector<1x128x256xbf16> to vector<128x256xbf16>
      %cst = arith.constant dense<0.000000e+00> : vector<16x256xf32>
      %10 = tpu.matmul %7, %9, %cst {dimension_numbers = #tpu.dot_dimension_numbers<[1], [0], [0], [1], [0, 0, 1, 1], [], []>} : vector<16x128xbf16>, vector<128x256xbf16>, vector<16x256xf32> -> vector<16x256xf32>
      %11 = vector.extract_strided_slice %10 {offsets = [0, 0], sizes = [16, 128], strides = [1, 1]} : vector<16x256xf32> to vector<16x128xf32>
      %12 = vector.extract_strided_slice %10 {offsets = [0, 128], sizes = [16, 128], strides = [1, 1]} : vector<16x256xf32> to vector<16x128xf32>
      %13 = arith.negf %11 : vector<16x128xf32>
      %14 = math.exp %13 : vector<16x128xf32>
      %cst_7 = arith.constant 1.000000e+00 : f32
      %15 = vector.broadcast %cst_7 : f32 to vector<16x128xf32>
      %16 = arith.addf %15, %14 : vector<16x128xf32>
      %17 = arith.divf %15, %16 : vector<16x128xf32>
      %18 = arith.mulf %11, %17 : vector<16x128xf32>
      %19 = arith.mulf %18, %12 : vector<16x128xf32>
      %c0_8 = arith.constant 0 : index
      %c0_9 = arith.constant 0 : index
      %20 = vector.load %arg5[%c0_8, %c0_9] : memref<16x1xf32, #tpu.memory_space<vmem>>, vector<16x1xf32>
      %21 = vector.broadcast %20 : vector<16x1xf32> to vector<16x128xf32>
      %22 = arith.mulf %19, %21 : vector<16x128xf32>
      %c0_10 = arith.constant 0 : index
      %c0_11 = arith.constant 0 : index
      %23 = vector.load %arg9[%c0_10, %c0_11] : memref<16x128xf32, #tpu.memory_space<vmem>>, vector<16x128xf32>
      %24 = arith.truncf %22 : vector<16x128xf32> to vector<16x128xbf16>
      %c0_12 = arith.constant 0 : index
      %c0_13 = arith.constant 0 : index
      %c0_14 = arith.constant 0 : index
      %25 = vector.load %arg7[%c0_12, %c0_13, %c0_14] : memref<1x128x128xbf16, #tpu.memory_space<vmem>>, vector<1x128x128xbf16>
      %26 = vector.shape_cast %25 : vector<1x128x128xbf16> to vector<128x128xbf16>
      %cst_15 = arith.constant dense<0.000000e+00> : vector<16x128xf32>
      %27 = tpu.matmul %24, %26, %cst_15 {dimension_numbers = #tpu.dot_dimension_numbers<[1], [0], [0], [1], [0, 0, 1, 1], [], []>} : vector<16x128xbf16>, vector<128x128xbf16>, vector<16x128xf32> -> vector<16x128xf32>
      %28 = arith.addf %23, %27 : vector<16x128xf32>
      %c0_16 = arith.constant 0 : index
      %c0_17 = arith.constant 0 : index
      %29 = vector.load %arg9[%c0_16, %c0_17] : memref<16x128xf32, #tpu.memory_space<vmem>>, vector<16x128xf32>
      tpu.vector_store %arg9[%c0_16, %c0_17], %28 {strides = array<i32>} : memref<16x128xf32, #tpu.memory_space<vmem>>, vector<16x128xf32>,
      %c1_i32 = arith.constant 1 : i32
      %30 = arith.cmpi eq, %arg1, %c1_i32 : i32
      %31 = arith.extui %30 : i1 to i32
      %c0_i32_18 = arith.constant 0 : i32
      %32 = arith.cmpi ne, %31, %c0_i32_18 : i32
      scf.if %32 {
        %c0_19 = arith.constant 0 : index
        %c0_20 = arith.constant 0 : index
        %33 = vector.load %arg9[%c0_19, %c0_20] : memref<16x128xf32, #tpu.memory_space<vmem>>, vector<16x128xf32>
        %c0_21 = arith.constant 0 : index
        %c0_22 = arith.constant 0 : index
        %34 = vector.load %arg8[%c0_21, %c0_22] : memref<16x128xf32, #tpu.memory_space<vmem>>, vector<16x128xf32>
        tpu.vector_store %arg8[%c0_21, %c0_22], %33 {strides = array<i32>} : memref<16x128xf32, #tpu.memory_space<vmem>>, vector<16x128xf32>,
      } else {
      }
    } else {
    }
    return
  }
  func.func @transform_0(%arg0: i32, %arg1: i32, %arg2: memref<8xi32, #tpu.memory_space<smem>>, %arg3: memref<1xi32, #tpu.memory_space<smem>>) -> (i32, i32) {
    %c0_i32 = arith.constant 0 : i32
    %c0_i32_0 = arith.constant 0 : i32
    return %arg0, %c0_i32 : i32, i32
  }
  func.func @transform_1(%arg0: i32, %arg1: i32, %arg2: memref<8xi32, #tpu.memory_space<smem>>, %arg3: memref<1xi32, #tpu.memory_space<smem>>) -> (i32, i32) {
    %c0_i32 = arith.constant 0 : i32
    %c0_i32_0 = arith.constant 0 : i32
    return %arg0, %c0_i32 : i32, i32
  }
  func.func @transform_2(%arg0: i32, %arg1: i32, %arg2: memref<8xi32, #tpu.memory_space<smem>>, %arg3: memref<1xi32, #tpu.memory_space<smem>>) -> (i32, i32, i32) {
    %0 = arith.index_cast %arg0 : i32 to index
    %1 = memref.load %arg2[%0] : memref<8xi32, #tpu.memory_space<smem>>
    %c0_i32 = arith.constant 0 : i32
    %c0_i32_0 = arith.constant 0 : i32
    return %1, %c0_i32, %arg1 : i32, i32, i32
  }
  func.func @transform_3(%arg0: i32, %arg1: i32, %arg2: memref<8xi32, #tpu.memory_space<smem>>, %arg3: memref<1xi32, #tpu.memory_space<smem>>) -> (i32, i32, i32) {
    %0 = arith.index_cast %arg0 : i32 to index
    %1 = memref.load %arg2[%0] : memref<8xi32, #tpu.memory_space<smem>>
    %c0_i32 = arith.constant 0 : i32
    %c0_i32_0 = arith.constant 0 : i32
    return %1, %arg1, %c0_i32 : i32, i32, i32
  }
  func.func @transform_4(%arg0: i32, %arg1: i32, %arg2: memref<8xi32, #tpu.memory_space<smem>>, %arg3: memref<1xi32, #tpu.memory_space<smem>>) -> (i32, i32) {
    %c0_i32 = arith.constant 0 : i32
    %c0_i32_0 = arith.constant 0 : i32
    return %arg0, %c0_i32 : i32, i32
  }
}

</mosaic_0001>

<llo_original>
// kernel: sparse_moe_forward.1
$region0: #{sparse_moe_forward.1}
  #allocation0 [shape = 'u32[]', space=smem, size = 0x4, offset = 0x4, fixed_abs, tag = 'smem constant byte address 0x4 - core index']
  #allocation1 [shape = 'u32[144,128]{1,0:T(1,128)}', space=vmem, size = 0x12000, scoped, tag = 'internal scratch']
  #allocation2 [shape = 'f32[16,128]{1,0:T(8,128)}', space=vmem, size = 0x2000, scoped, tag = 'scratch operand']
  #allocation3 [shape = 's32[1]{0}', space=sflag, size = 0x4, scoped, tag = 'scoped memory for sparse_moe_forward.1']
  #allocation4 [shape = 'u8[512]{0}', space=smem, size = 0x200, scoped, tag = 'prefetched SMEM operand 0']
  #allocation5 [shape = 's32[1]{0:T(128)S(6)}', space=smem, size = 0x200, scoped, tag = 'prefetched SMEM operand 1']
  %s0 = inlined_call_operand.vmem [shape: s32[8], index: 0, kind: input, shape index: {}]
  %s1 = inlined_call_operand.<no memory space> [shape: s32[1], index: 1, kind: input, shape index: {}]
  %s2 = inlined_call_operand.vmem [shape: bf16[128,128], index: 2, kind: input, shape index: {}]
  %s3 = inlined_call_operand.vmem [shape: f32[128,1], index: 3, kind: input, shape index: {}]
  %s4 = inlined_call_operand.vmem [shape: bf16[16,128,512], index: 4, kind: input, shape index: {}]
  %s5 = inlined_call_operand.vmem [shape: bf16[16,256,128], index: 5, kind: input, shape index: {}]
  %s6 = inlined_call_operand.vmem [shape: f32[128,128], index: 6, kind: output, shape index: {}]
  %s7 = sld [smem:[#allocation0]]
  $region99: #{sparse_moe_forward.1} parent=0
    _
  %s9 = ssub.s32 1, %s7
  %s10 = scalar_select 0, %s9, %s7
  %s11 = sshll.u32 %s0, 4
  %s12 = int_to_ptr.vmem [resolvable:$true] %s11
  %14 = dma.vmem_to_smem %s12, 16, [#allocation4], [#allocation3]
  %15 = sst [smem:[#allocation5]] %s1
  %16 = dma.done [#allocation3], 16
  %17 = sfence
  $region1: #{sparse_moe_forward.1} parent=0
    #allocation6 [shape = 'u8[131072]{0}', space=vmem, size = 0x20000, scoped, tag = 'input window, operand 4']
    loop: start=0, step=1, limit=18
    $region2: #{sparse_moe_forward.1} parent=1 // loop_pre_header
      _
    $region3: #{sparse_moe_forward.1} parent=1 // loop_header
      %s19 = sphi 0, %s23
      %p20 = scmp.ge.s32.totalorder %s19, 18
      %s26 = sphi 0, %s38
      %s27 = sphi 0, %s34
      %s28 = sphi 0, %s26
      %s29 = sphi 0, %s27
      %s30 = sphi 0, %s28
      %s31 = sphi 0, %s29
      %s41 = sphi 0, %s43
      %s44 = sphi 0, %s41
      %s45 = sphi 0, %s44
      %s61 = sphi 0, %s45
      %s67 = sphi 0, %s69
      %s70 = sphi 0, %s67
      %s71 = sphi 0, %s70
      %s87 = sphi 0, %s71
      %s97 = sphi 0, %s99
      %s100 = sphi 0, %s97
      %s101 = sphi 0, %s100
      %s117 = sphi 0, %s101
      %s127 = sphi 0, %s129
      %s130 = sphi 0, %s127
      %s131 = sphi 0, %s130
      %s147 = sphi 0, %s131
      %s153 = sphi 0, %s155
      %s156 = sphi 0, %s153
      %s157 = sphi 0, %s156
      %s173 = sphi 0, %s157
    $region4: #{sparse_moe_forward.1} parent=1 // loop_header_branch
      %22 = sbr.rel (%p20) target = $region8
    $region5: #{sparse_moe_forward.1} parent=1 // loop_body
      %s24 = ssub.s32 %s19, 1
      %s25 = ssub.s32 %s19, 2
      %s32 = sadd.s32 1, %s27
      %p33 = scmp.ge.s32.totalorder %s32, 2
      %s34 = scalar_select %p33, 0, %s32
      %s35 = sadd.s32 1, %s26
      %s36 = scalar_select %p33, %s35, %s26
      %p37 = scmp.ge.s32.totalorder %s36, 8
      %s38 = scalar_select %p37, 0, %s36
      %s39 = ssub.s32 %s26, %s38
      %p40 = scmp.eq.s32.totalorder %s39, 0
      %s42 = sadd.s32 %s41, 1
      %s43 = scalar_select %p40, %s41, %s42
      %p46 = pneg %p40
      %p47 = scmp.eq.s32.totalorder %s19, 15
      %p48 = por %p46, %p47
      %p49 = scmp.ne.s32.totalorder %s41, %s44
      %p50 = scmp.eq.s32.totalorder %s19, 0
      %p51 = por %p49, %p50
      %p52 = scmp.ne.s32.totalorder %s41, %s44
      %p53 = scmp.eq.s32.totalorder %s24, 15
      %p54 = por %p52, %p53
      %p55 = scmp.ne.s32.totalorder %s44, %s45
      %p56 = scmp.eq.s32.totalorder %s24, 0
      %p57 = por %p55, %p56
      %p58 = scmp.ne.s32.totalorder %s44, %s45
      %p59 = scmp.eq.s32.totalorder %s25, 15
      %p60 = por %p58, %p59
      %p62 = scmp.ne.s32.totalorder %s45, %s61
      %p63 = scmp.eq.s32.totalorder %s25, 0
      %p64 = por %p62, %p63
      %s65 = ssub.s32 %s26, %s38
      %p66 = scmp.eq.s32.totalorder %s65, 0
      %s68 = sadd.s32 %s67, 1
      %s69 = scalar_select %p66, %s67, %s68
      %p72 = pneg %p66
      %p73 = scmp.eq.s32.totalorder %s19, 15
      %p74 = por %p72, %p73
      %p75 = scmp.ne.s32.totalorder %s67, %s70
      %p76 = scmp.eq.s32.totalorder %s19, 0
      %p77 = por %p75, %p76
      %p78 = scmp.ne.s32.totalorder %s67, %s70
      %p79 = scmp.eq.s32.totalorder %s24, 15
      %p80 = por %p78, %p79
      %p81 = scmp.ne.s32.totalorder %s70, %s71
      %p82 = scmp.eq.s32.totalorder %s24, 0
      %p83 = por %p81, %p82
      %p84 = scmp.ne.s32.totalorder %s70, %s71
      %p85 = scmp.eq.s32.totalorder %s25, 15
      %p86 = por %p84, %p85
      %p88 = scmp.ne.s32.totalorder %s71, %s87
      %p89 = scmp.eq.s32.totalorder %s25, 0
      %p90 = por %p88, %p89
      %s91 = sld [smem:[#allocation4 + %s26]]
      %s92 = sld [smem:[#allocation4 + %s38]]
      %s93 = ssub.s32 %s91, %s92
      %s94 = ssub.s32 %s27, %s34
      %s95 = sor.u32 %s93, %s94
      %p96 = scmp.eq.s32.totalorder %s95, 0
      %s98 = sadd.s32 %s97, 1
      %s99 = scalar_select %p96, %s97, %s98
      %p102 = pneg %p96
      %p103 = scmp.eq.s32.totalorder %s19, 15
      %p104 = por %p102, %p103
      %p105 = scmp.ne.s32.totalorder %s97, %s100
      %p106 = scmp.eq.s32.totalorder %s19, 0
      %p107 = por %p105, %p106
      %p108 = scmp.ne.s32.totalorder %s97, %s100
      %p109 = scmp.eq.s32.totalorder %s24, 15
      %p110 = por %p108, %p109
      %p111 = scmp.ne.s32.totalorder %s100, %s101
      %p112 = scmp.eq.s32.totalorder %s24, 0
      %p113 = por %p111, %p112
      %p114 = scmp.ne.s32.totalorder %s100, %s101
      %p115 = scmp.eq.s32.totalorder %s25, 15
      %p116 = por %p114, %p115
      %p118 = scmp.ne.s32.totalorder %s101, %s117
      %p119 = scmp.eq.s32.totalorder %s25, 0
      %p120 = por %p118, %p119
      %s121 = sld [smem:[#allocation4 + %s26]]
      %s122 = sld [smem:[#allocation4 + %s38]]
      %s123 = ssub.s32 %s121, %s122
      %s124 = ssub.s32 %s27, %s34
      %s125 = sor.u32 %s123, %s124
      %p126 = scmp.eq.s32.totalorder %s125, 0
      %s128 = sadd.s32 %s127, 1
      %s129 = scalar_select %p126, %s127, %s128
      %p132 = pneg %p126
      %p133 = scmp.eq.s32.totalorder %s19, 15
      %p134 = por %p132, %p133
      %p135 = scmp.ne.s32.totalorder %s127, %s130
      %p136 = scmp.eq.s32.totalorder %s19, 0
      %p137 = por %p135, %p136
      %p138 = scmp.ne.s32.totalorder %s127, %s130
      %p139 = scmp.eq.s32.totalorder %s24, 15
      %p140 = por %p138, %p139
      %p141 = scmp.ne.s32.totalorder %s130, %s131
      %p142 = scmp.eq.s32.totalorder %s24, 0
      %p143 = por %p141, %p142
      %p144 = scmp.ne.s32.totalorder %s130, %s131
      %p145 = scmp.eq.s32.totalorder %s25, 15
      %p146 = por %p144, %p145
      %p148 = scmp.ne.s32.totalorder %s131, %s147
      %p149 = scmp.eq.s32.totalorder %s25, 0
      %p150 = por %p148, %p149
      %s151 = ssub.s32 %s26, %s38
      %p152 = scmp.eq.s32.totalorder %s151, 0
      %s154 = sadd.s32 %s153, 1
      %s155 = scalar_select %p152, %s153, %s154
      %p158 = pneg %p152
      %p159 = scmp.eq.s32.totalorder %s19, 15
      %p160 = por %p158, %p159
      %p161 = scmp.ne.s32.totalorder %s153, %s156
      %p162 = scmp.eq.s32.totalorder %s19, 0
      %p163 = por %p161, %p162
      %p164 = scmp.ne.s32.totalorder %s153, %s156
      %p165 = scmp.eq.s32.totalorder %s24, 15
      %p166 = por %p164, %p165
      %p167 = scmp.ne.s32.totalorder %s156, %s157
      %p168 = scmp.eq.s32.totalorder %s24, 0
      %p169 = por %p167, %p168
      %p170 = scmp.ne.s32.totalorder %s156, %s157
      %p171 = scmp.eq.s32.totalorder %s25, 15
      %p172 = por %p170, %p171
      %p174 = scmp.ne.s32.totalorder %s157, %s173
      %p175 = scmp.eq.s32.totalorder %s25, 0
      %p176 = por %p174, %p175
      %p177 = scmp.le.s32.totalorder 1, %s19
      %p178 = scmp.lt.s32.totalorder %s19, 17
      %p179 = pnand %p177, %p178
      %p180 = pneg %p179
      // Predicated region
      $region9: #{sparse_moe_forward.1} parent=5 // pred_check
        _
      $region10: #{sparse_moe_forward.1} parent=5 // pred_check_branch
        %182 = sbr.rel (%p179) target = $region12
      $region11: #{sparse_moe_forward.1} parent=5 // pred_region
        %s183 = ssub.s32 %s19, 1
      $region12: #{sparse_moe_forward.1} parent=5 // pred_fallthru
        _
      %p184 = scmp.lt.s32.totalorder %s19, 16
      // Predicated region
      $region13: #{sparse_moe_forward.1} parent=5 // pred_check
        %p185 = pneg %p184
      $region14: #{sparse_moe_forward.1} parent=5 // pred_check_branch
        %187 = sbr.rel (%p185) target = $region16
      $region15: #{sparse_moe_forward.1} parent=5 // pred_region
        // Predicated region
        $region17: #{sparse_moe_forward.1} parent=15 // pred_check
          %p188 = pneg %p51
        $region18: #{sparse_moe_forward.1} parent=15 // pred_check_branch
          %190 = sbr.rel (%p188) target = $region20
        $region19: #{sparse_moe_forward.1} parent=15 // pred_region
          %s191 = smul.u32 2, %s26
          %p192 = scmp.lt.s32.totalorder %s191, 15
          %s193 = scalar_select %p192, %s191, 15
          %s194 = smul.addr %s193, 4
          %s195 = scalar_lea.vmem %s2, %s194
          %s196 = smul.u32 2, %s26
        $region20: #{sparse_moe_forward.1} parent=15 // pred_fallthru
          _
        // Predicated region
        $region21: #{sparse_moe_forward.1} parent=15 // pred_check
          %p197 = pneg %p77
        $region22: #{sparse_moe_forward.1} parent=15 // pred_check_branch
          %199 = sbr.rel (%p197) target = $region24
        $region23: #{sparse_moe_forward.1} parent=15 // pred_region
          %s200 = smul.u32 2, %s26
          %p201 = scmp.lt.s32.totalorder %s200, 15
          %s202 = scalar_select %p201, %s200, 15
          %s203 = smul.addr %s202, 8
          %s204 = scalar_lea.vmem %s3, %s203
          %s205 = smul.u32 2, %s26
        $region24: #{sparse_moe_forward.1} parent=15 // pred_fallthru
          _
        // Predicated region
        $region25: #{sparse_moe_forward.1} parent=15 // pred_check
          %p206 = pneg %p107
        $region26: #{sparse_moe_forward.1} parent=15 // pred_check_branch
          %208 = sbr.rel (%p206) target = $region28
        $region27: #{sparse_moe_forward.1} parent=15 // pred_region
          %s209 = sand.u32 %s97, 1
          %s210 = sand.u32 %s97, 1
          %s211 = smul.addr %s210, 128
          %s212 = scalar_lea.vmem [#allocation6], %s211
          %s213 = sld [smem:[#allocation4 + %s26]]
          %s214 = smul.u32 2, %s27
          %s215 = smul.addr %s213, 64
          %s216 = sadd.s32 %s214, %s215
          %s217 = smul.addr %s216, 4
          %s218 = scalar_lea.vmem %s4, %s217
          // Predicated region
          $region29: #{sparse_moe_forward.1} parent=27 // pred_check
            _
          $region30: #{sparse_moe_forward.1} parent=27 // pred_check_branch
            %220 = sbr.rel (0) target = $region32
          $region31: #{sparse_moe_forward.1} parent=27 // pred_region
            // Predicated region
            $region33: #{sparse_moe_forward.1} parent=31 // pred_check
              _
            $region34: #{sparse_moe_forward.1} parent=31 // pred_check_branch
              %222 = sbr.rel (0) target = $region36
            $region35: #{sparse_moe_forward.1} parent=31 // pred_region
              // Predicated region
              $region48: #{sparse_moe_forward.1} parent=35 // pred_check
                _
              $region49: #{sparse_moe_forward.1} parent=35 // pred_check_branch
                %268 = sbr.rel (0) target = $region51
              $region50: #{sparse_moe_forward.1} parent=35 // pred_region
                loop: start=0, step=1, limit=1
                $region52: #{sparse_moe_forward.1} parent=50 // loop_pre_header
                  _
                $region53: #{sparse_moe_forward.1} parent=50 // loop_header
                  %s270 = sphi 0, %s274
                  %p271 = scmp.ge.s32.totalorder %s270, 1
                  %s275 = sphi %s218, %s218
                  %s276 = sphi %s212, %s212
                $region54: #{sparse_moe_forward.1} parent=50 // loop_header_branch
                  %273 = sbr.rel (%p271) target = $region58
                $region55: #{sparse_moe_forward.1} parent=50 // loop_body
                  %v277 = vld [vmem:[%s275] sm:$0xff]
                  %278 = vst [vmem:[%s276] sm:$0xff] %v277
                  %v279 = vld [vmem:[%s275 + $0x10] sm:$0xff]
                  %280 = vst [vmem:[%s276 + $0x8] sm:$0xff] %v279
                  %v281 = vld [vmem:[%s275 + $0x20] sm:$0xff]
                  %282 = vst [vmem:[%s276 + $0x10] sm:$0xff] %v281
                  %v283 = vld [vmem:[%s275 + $0x30] sm:$0xff]
                  %284 = vst [vmem:[%s276 + $0x18] sm:$0xff] %v283
                  %v285 = vld [vmem:[%s275 + $0x40] sm:$0xff]
                  %286 = vst [vmem:[%s276 + $0x20] sm:$0xff] %v285
                  %v287 = vld [vmem:[%s275 + $0x50] sm:$0xff]
                  %288 = vst [vmem:[%s276 + $0x28] sm:$0xff] %v287
                  %v289 = vld [vmem:[%s275 + $0x60] sm:$0xff]
                  %290 = vst [vmem:[%s276 + $0x30] sm:$0xff] %v289
                  %v291 = vld [vmem:[%s275 + $0x70] sm:$0xff]
                  %292 = vst [vmem:[%s276 + $0x38] sm:$0xff] %v291
                  %v293 = vld [vmem:[%s275 + $0x80] sm:$0xff]
                  %294 = vst [vmem:[%s276 + $0x40] sm:$0xff] %v293
                  %v295 = vld [vmem:[%s275 + $0x90] sm:$0xff]
                  %296 = vst [vmem:[%s276 + $0x48] sm:$0xff] %v295
                  %v297 = vld [vmem:[%s275 + $0xa0] sm:$0xff]
                  %298 = vst [vmem:[%s276 + $0x50] sm:$0xff] %v297
                  %v299 = vld [vmem:[%s275 + $0xb0] sm:$0xff]
                  %300 = vst [vmem:[%s276 + $0x58] sm:$0xff] %v299
                  %v301 = vld [vmem:[%s275 + $0xc0] sm:$0xff]
                  %302 = vst [vmem:[%s276 + $0x60] sm:$0xff] %v301
                  %v303 = vld [vmem:[%s275 + $0xd0] sm:$0xff]
                  %304 = vst [vmem:[%s276 + $0x68] sm:$0xff] %v303
                  %v305 = vld [vmem:[%s275 + $0xe0] sm:$0xff]
                  %306 = vst [vmem:[%s276 + $0x70] sm:$0xff] %v305
                  %v307 = vld [vmem:[%s275 + $0xf0] sm:$0xff]
                  %308 = vst [vmem:[%s276 + $0x78] sm:$0xff] %v307
                $region56: #{sparse_moe_forward.1} parent=50 // loop_footer
                  %s274 = sadd.s32 1, %s270
                $region57: #{sparse_moe_forward.1} parent=50 // loop_footer_branch
                  %269 = sbr.rel target = $region53
                $region58: #{sparse_moe_forward.1} parent=50 // loop_exit
                  _
              $region51: #{sparse_moe_forward.1} parent=35 // pred_fallthru
                _
              // Predicated region
              $region59: #{sparse_moe_forward.1} parent=35 // pred_check
                _
              $region60: #{sparse_moe_forward.1} parent=35 // pred_check_branch
                %310 = sbr.rel target = $region62
              $region61: #{sparse_moe_forward.1} parent=35 // pred_region
                _
              $region62: #{sparse_moe_forward.1} parent=35 // pred_fallthru
                _
            $region36: #{sparse_moe_forward.1} parent=31 // pred_fallthru
              _
            // Predicated region
            $region37: #{sparse_moe_forward.1} parent=31 // pred_check
              _
            $region38: #{sparse_moe_forward.1} parent=31 // pred_check_branch
              %224 = sbr.rel target = $region40
            $region39: #{sparse_moe_forward.1} parent=31 // pred_region
              %s226 = ssub.s32 256, 1
              loop: start=0, step=1, limit=1
              $region41: #{sparse_moe_forward.1} parent=39 // loop_pre_header
                _
              $region42: #{sparse_moe_forward.1} parent=39 // loop_header
                %s228 = sphi 0, %s232
                %p229 = scmp.ge.s32.totalorder %s228, 1
                %s233 = sphi %s218, %s218
                %s234 = sphi %s212, %s212
              $region43: #{sparse_moe_forward.1} parent=39 // loop_header_branch
                %231 = sbr.rel (%p229) target = $region47
              $region44: #{sparse_moe_forward.1} parent=39 // loop_body
                %v235 = vld [vmem:[%s233] sm:%s226]
                %236 = vst [vmem:[%s234] sm:%s226] %v235
                %v237 = vld [vmem:[%s233 + $0x10] sm:%s226]
                %238 = vst [vmem:[%s234 + $0x8] sm:%s226] %v237
                %v239 = vld [vmem:[%s233 + $0x20] sm:%s226]
                %240 = vst [vmem:[%s234 + $0x10] sm:%s226] %v239
                %v241 = vld [vmem:[%s233 + $0x30] sm:%s226]
                %242 = vst [vmem:[%s234 + $0x18] sm:%s226] %v241
                %v243 = vld [vmem:[%s233 + $0x40] sm:%s226]
                %244 = vst [vmem:[%s234 + $0x20] sm:%s226] %v243
                %v245 = vld [vmem:[%s233 + $0x50] sm:%s226]
                %246 = vst [vmem:[%s234 + $0x28] sm:%s226] %v245
                %v247 = vld [vmem:[%s233 + $0x60] sm:%s226]
                %248 = vst [vmem:[%s234 + $0x30] sm:%s226] %v247
                %v249 = vld [vmem:[%s233 + $0x70] sm:%s226]
                %250 = vst [vmem:[%s234 + $0x38] sm:%s226] %v249
                %v251 = vld [vmem:[%s233 + $0x80] sm:%s226]
                %252 = vst [vmem:[%s234 + $0x40] sm:%s226] %v251
                %v253 = vld [vmem:[%s233 + $0x90] sm:%s226]
                %254 = vst [vmem:[%s234 + $0x48] sm:%s226] %v253
                %v255 = vld [vmem:[%s233 + $0xa0] sm:%s226]
                %256 = vst [vmem:[%s234 + $0x50] sm:%s226] %v255
                %v257 = vld [vmem:[%s233 + $0xb0] sm:%s226]
                %258 = vst [vmem:[%s234 + $0x58] sm:%s226] %v257
                %v259 = vld [vmem:[%s233 + $0xc0] sm:%s226]
                %260 = vst [vmem:[%s234 + $0x60] sm:%s226] %v259
                %v261 = vld [vmem:[%s233 + $0xd0] sm:%s226]
                %262 = vst [vmem:[%s234 + $0x68] sm:%s226] %v261
                %v263 = vld [vmem:[%s233 + $0xe0] sm:%s226]
                %264 = vst [vmem:[%s234 + $0x70] sm:%s226] %v263
                %v265 = vld [vmem:[%s233 + $0xf0] sm:%s226]
                %266 = vst [vmem:[%s234 + $0x78] sm:%s226] %v265
              $region45: #{sparse_moe_forward.1} parent=39 // loop_footer
                %s232 = sadd.s32 1, %s228
              $region46: #{sparse_moe_forward.1} parent=39 // loop_footer_branch
                %227 = sbr.rel target = $region42
              $region47: #{sparse_moe_forward.1} parent=39 // loop_exit
                _
            $region40: #{sparse_moe_forward.1} parent=31 // pred_fallthru
              _
          $region32: #{sparse_moe_forward.1} parent=27 // pred_fallthru
            _
          %311 = vnop
        $region28: #{sparse_moe_forward.1} parent=15 // pred_fallthru
          _
        // Predicated region
        $region63: #{sparse_moe_forward.1} parent=15 // pred_check
          %p312 = pneg %p137
        $region64: #{sparse_moe_forward.1} parent=15 // pred_check_branch
          %314 = sbr.rel (%p312) target = $region66
        $region65: #{sparse_moe_forward.1} parent=15 // pred_region
          %s315 = sld [smem:[#allocation4 + %s26]]
          %s316 = smul.u32 16, %s27
          %p317 = scmp.lt.s32.totalorder %s315, 15
          %s318 = scalar_select %p317, %s315, 15
          %p319 = scmp.lt.s32.totalorder %s316, 31
          %s320 = scalar_select %p319, %s316, 31
          %s321 = smul.addr %s318, 32
          %s322 = sadd.s32 %s320, %s321
          %s323 = smul.addr %s322, 4
          %s324 = scalar_lea.vmem %s5, %s323
          %s325 = sld [smem:[#allocation4 + %s26]]
          %s326 = smul.u32 16, %s27
        $region66: #{sparse_moe_forward.1} parent=15 // pred_fallthru
          _
      $region16: #{sparse_moe_forward.1} parent=5 // pred_fallthru
        _
      %p327 = scmp.le.s32.totalorder 1, %s19
      %p328 = scmp.lt.s32.totalorder %s19, 17
      %p329 = pnand %p327, %p328
      %p330 = pneg %p329
      // Predicated region
      $region67: #{sparse_moe_forward.1} parent=5 // pred_check
        _
      $region68: #{sparse_moe_forward.1} parent=5 // pred_check_branch
        %332 = sbr.rel (%p329) target = $region70
      $region69: #{sparse_moe_forward.1} parent=5 // pred_region
        %s333 = ssub.s32 %s19, 1
        %s334 = sand.u32 %s100, 1
        %s335 = sand.u32 %s100, 1
        %s336 = smul.addr %s335, 128
        %s337 = scalar_lea.vmem [#allocation6], %s336
        // Predicated region
        $region71: #{sparse_moe_forward.1} parent=69 // pred_check
          %p338 = pneg %p113
        $region72: #{sparse_moe_forward.1} parent=69 // pred_check_branch
          %340 = sbr.rel (%p338) target = $region74
        $region73: #{sparse_moe_forward.1} parent=69 // pred_region
          _
        $region74: #{sparse_moe_forward.1} parent=69 // pred_fallthru
          _
        %s341 = smul.u32 2, %s28
        %p342 = scmp.lt.s32.totalorder %s341, 15
        %s343 = scalar_select %p342, %s341, 15
        %s344 = smul.addr %s343, 4
        %s345 = scalar_lea.vmem %s2, %s344
        %p346 = pneg %p57
        %p347 = pneg %p54
        %s348 = smul.u32 2, %s28
        %p349 = scmp.lt.s32.totalorder %s348, 15
        %s350 = scalar_select %p349, %s348, 15
        %s351 = smul.addr %s350, 8
        %s352 = scalar_lea.vmem %s3, %s351
        %p353 = pneg %p83
        %p354 = pneg %p80
        %s355 = sand.u32 %s100, 1
        %s356 = sand.u32 %s100, 1
        %s357 = smul.addr %s356, 128
        %s358 = scalar_lea.vmem [#allocation6], %s357
        %p359 = pneg %p113
        %p360 = pneg %p110
        %s361 = sld [smem:[#allocation4 + %s28]]
        %s362 = smul.u32 16, %s29
        %p363 = scmp.lt.s32.totalorder %s361, 15
        %s364 = scalar_select %p363, %s361, 15
        %p365 = scmp.lt.s32.totalorder %s362, 31
        %s366 = scalar_select %p365, %s362, 31
        %s367 = smul.addr %s364, 32
        %s368 = sadd.s32 %s366, %s367
        %s369 = smul.addr %s368, 4
        %s370 = scalar_lea.vmem %s5, %s369
        %p371 = pneg %p143
        %p372 = pneg %p140
        %p373 = pneg %p169
        %p374 = pneg %p166
        %s375 = smul.u32 2, %s28
        %p376 = scmp.lt.s32.totalorder %s375, 15
        %s377 = scalar_select %p376, %s375, 15
        %s378 = smul.addr %s377, 8
        %s379 = scalar_lea.vmem %s6, %s378
        %s380 = smul.u32 2, %s28
        %p381 = scmp.lt.s32.totalorder %s380, 15
        %s382 = scalar_select %p381, %s380, 15
        %s383 = smul.addr %s382, 4
        %s384 = scalar_lea.vmem %s2, %s383
        %s385 = smul.u32 2, %s28
        %s386 = smul.u32 2, %s28
        %p387 = scmp.lt.s32.totalorder %s386, 15
        %s388 = scalar_select %p387, %s386, 15
        %s389 = smul.addr %s388, 8
        %s390 = scalar_lea.vmem %s3, %s389
        %s391 = smul.u32 2, %s28
        %s392 = sld [smem:[#allocation4 + %s28]]
        %s393 = smul.u32 2, %s29
        %s394 = sld [smem:[#allocation4 + %s28]]
        %s395 = smul.u32 16, %s29
        %p396 = scmp.lt.s32.totalorder %s394, 15
        %s397 = scalar_select %p396, %s394, 15
        %p398 = scmp.lt.s32.totalorder %s395, 31
        %s399 = scalar_select %p398, %s395, 31
        %s400 = smul.addr %s397, 32
        %s401 = sadd.s32 %s399, %s400
        %s402 = smul.addr %s401, 4
        %s403 = scalar_lea.vmem %s5, %s402
        %s404 = sld [smem:[#allocation4 + %s28]]
        %s405 = smul.u32 16, %s29
        %s406 = smul.u32 2, %s28
        %p407 = scmp.lt.s32.totalorder %s406, 15
        %s408 = scalar_select %p407, %s406, 15
        %s409 = smul.addr %s408, 8
        %s410 = scalar_lea.vmem %s6, %s409
        %s411 = smul.u32 2, %s28
        %s413 = sld [smem:[#allocation5]]
        %p414 = scmp.lt.s32.totalorder %s28, %s413
        // Predicated region
        $region75: #{sparse_moe_forward.1} parent=69 // pred_check
          %p415 = pneg %p414
        $region76: #{sparse_moe_forward.1} parent=69 // pred_check_branch
          %417 = sbr.rel (%p415) target = $region78
        $region77: #{sparse_moe_forward.1} parent=69 // pred_region
          %p418 = scmp.eq.s32.totalorder %s29, 0
          // Predicated region
          $region79: #{sparse_moe_forward.1} parent=77 // pred_check
            %p419 = pneg %p418
          $region80: #{sparse_moe_forward.1} parent=77 // pred_check_branch
            %421 = sbr.rel (%p419) target = $region82
          $region81: #{sparse_moe_forward.1} parent=77 // pred_region
            %422 = vst [vmem:[#allocation2] sm:$0xff] 0.0
            %423 = vst [vmem:[#allocation2 + $0x8] sm:$0xff] 0.0
          $region82: #{sparse_moe_forward.1} parent=77 // pred_fallthru
            _
          %v424 = vld [vmem:[%s384] sm:$0xf]
          %v425 = vld [vmem:[%s384 + $0x4] sm:$0xf]
          %v426 = vld [vmem:[%s337] sm:$0xff]
          %v427 = vld [vmem:[%s337 + $0x8] sm:$0xff]
          %v428 = vld [vmem:[%s337 + $0x10] sm:$0xff]
          %v429 = vld [vmem:[%s337 + $0x18] sm:$0xff]
          %v430 = vld [vmem:[%s337 + $0x20] sm:$0xff]
          %v431 = vld [vmem:[%s337 + $0x28] sm:$0xff]
          %v432 = vld [vmem:[%s337 + $0x30] sm:$0xff]
          %v433 = vld [vmem:[%s337 + $0x38] sm:$0xff]
          %v434 = vld [vmem:[%s337 + $0x40] sm:$0xff]
          %v435 = vld [vmem:[%s337 + $0x48] sm:$0xff]
          %v436 = vld [vmem:[%s337 + $0x50] sm:$0xff]
          %v437 = vld [vmem:[%s337 + $0x58] sm:$0xff]
          %v438 = vld [vmem:[%s337 + $0x60] sm:$0xff]
          %v439 = vld [vmem:[%s337 + $0x68] sm:$0xff]
          %v440 = vld [vmem:[%s337 + $0x70] sm:$0xff]
          %v441 = vld [vmem:[%s337 + $0x78] sm:$0xff]
          %v444 = vunpack.c.l.b16 %v424
          %v445 = vunpack.c.l.b16 %v425
          %v446 = vpack.c.b16 %v445, %v444
          %v464 = vunpack.c.l.b16 %v426
          %v465 = vunpack.c.h.b16 %v426
          %v466 = vunpack.c.l.b16 %v427
          %v467 = vunpack.c.h.b16 %v427
          %v468 = vunpack.c.l.b16 %v428
          %v469 = vunpack.c.h.b16 %v428
          %v470 = vunpack.c.l.b16 %v429
          %v471 = vunpack.c.h.b16 %v429
          %v472 = vunpack.c.l.b16 %v430
          %v473 = vunpack.c.h.b16 %v430
          %v474 = vunpack.c.l.b16 %v431
          %v475 = vunpack.c.h.b16 %v431
          %v476 = vunpack.c.l.b16 %v432
          %v477 = vunpack.c.h.b16 %v432
          %v478 = vunpack.c.l.b16 %v433
          %v479 = vunpack.c.h.b16 %v433
          %v480 = vunpack.c.l.b16 %v434
          %v481 = vunpack.c.h.b16 %v434
          %v482 = vunpack.c.l.b16 %v435
          %v483 = vunpack.c.h.b16 %v435
          %v484 = vunpack.c.l.b16 %v436
          %v485 = vunpack.c.h.b16 %v436
          %v486 = vunpack.c.l.b16 %v437
          %v487 = vunpack.c.h.b16 %v437
          %v488 = vunpack.c.l.b16 %v438
          %v489 = vunpack.c.h.b16 %v438
          %v490 = vunpack.c.l.b16 %v439
          %v491 = vunpack.c.h.b16 %v439
          %v492 = vunpack.c.l.b16 %v440
          %v493 = vunpack.c.h.b16 %v440
          %v494 = vunpack.c.l.b16 %v441
          %v495 = vunpack.c.h.b16 %v441
          %v496 = vpack.c.b16 %v466, %v464
          %v497 = vpack.c.b16 %v467, %v465
          %v498 = vpack.c.b16 %v470, %v468
          %v499 = vpack.c.b16 %v471, %v469
          %v500 = vpack.c.b16 %v474, %v472
          %v501 = vpack.c.b16 %v475, %v473
          %v502 = vpack.c.b16 %v478, %v476
          %v503 = vpack.c.b16 %v479, %v477
          %v504 = vpack.c.b16 %v482, %v480
          %v505 = vpack.c.b16 %v483, %v481
          %v506 = vpack.c.b16 %v486, %v484
          %v507 = vpack.c.b16 %v487, %v485
          %v508 = vpack.c.b16 %v490, %v488
          %v509 = vpack.c.b16 %v491, %v489
          %v510 = vpack.c.b16 %v494, %v492
          %v511 = vpack.c.b16 %v495, %v493
          %528 = vmatprep.subr.bf16.mxu0 %v511
          %529 = vmatpush1.bf16.msra.mxu0 %v510
          %530 = vmatprep.subr.bf16.mxu0 %v509
          %531 = vmatpush1.bf16.msra.mxu0 %v508
          %532 = vmatprep.subr.bf16.mxu0 %v507
          %533 = vmatpush1.bf16.msra.mxu0 %v506
          %534 = vmatprep.subr.bf16.mxu0 %v505
          %535 = vmatpush1.bf16.msra.mxu0 %v504
          %536 = vmatprep.subr.bf16.mxu0 %v503
          %537 = vmatpush1.bf16.msra.mxu0 %v502
          %538 = vmatprep.subr.bf16.mxu0 %v501
          %539 = vmatpush1.bf16.msra.mxu0 %v500
          %540 = vmatprep.subr.bf16.mxu0 %v499
          %541 = vmatpush1.bf16.msra.mxu0 %v498
          %542 = vmatprep.subr.bf16.mxu0 %v497
          %543 = vmatpush1.bf16.msra.mxu0 %v496
          %544 = vmatprep.subr.bf16.mxu0 0
          %545 = vmatpush2.bf16.msra.mxu0 0
          %546 = vmatprep.subr.bf16.mxu0 0
          %547 = vmatpush2.bf16.msra.mxu0 0
          %548 = vmatprep.subr.bf16.mxu0 0
          %549 = vmatpush2.bf16.msra.mxu0 0
          %550 = vmatprep.subr.bf16.mxu0 0
          %551 = vmatpush2.bf16.msra.mxu0 0
          %552 = vmatprep.subr.bf16.mxu0 0
          %553 = vmatpush2.bf16.msra.mxu0 0
          %554 = vmatprep.subr.bf16.mxu0 0
          %555 = vmatpush2.bf16.msra.mxu0 0
          %556 = vmatprep.subr.bf16.mxu0 0
          %557 = vmatpush2.bf16.msra.mxu0 0
          %558 = vmatprep.subr.bf16.mxu0 0
          %559 = vmatpush2.bf16.msra.mxu0 0
          %560 = vmatprep.mubr.bf16.mxu0 0
          %561 = vmatmul.mubr.bf16.gmra.mxu0 %v446
          %v562 = vpop.f32.mrf.mxu0
          %v563 = vadd.f32 0.0, %v562
          %v564 = vpop.f32.mrf.mxu0
          %v565 = vadd.f32 0.0, %v564
          %v566 = vpop.f32.mrf.mxu0
          %v567 = vadd.f32 0.0, %v566
          %v568 = vpop.f32.mrf.mxu0
          %v569 = vadd.f32 0.0, %v568
          %570 = vdwg.mxu0
          %v571 = vxor.u32 %v563, 2147483648
          %v572 = vxor.u32 %v567, 2147483648
          %v573 = vmul.f32 %v571, 1.442695
          %v574 = vpow.pop %v573
          %v575 = vmul.f32 %v572, 1.442695
          %v576 = vpow.pop %v575
          %v577 = vadd.f32 %v574, 1.0
          %v578 = vadd.f32 %v576, 1.0
          %v579 = vrcp.pop %v577
          %v580 = vmul.f32 1.0, %v579
          %v581 = vrcp.pop %v578
          %v582 = vmul.f32 1.0, %v581
          %v583 = vmul.f32 %v563, %v580
          %v584 = vmul.f32 %v567, %v582
          %v585 = vmul.f32 %v583, %v565
          %v586 = vmul.f32 %v584, %v569
          %v587 = vld [vmem:[%s390] sm:$0xff]
          %v588 = vld [vmem:[%s390 + $0x8] sm:$0xff]
          %590 = vset.pattern.permute.xlu0 0
          %591 = vperm.xlu0 %590, %v587
          %v592 = vpop.permute.xlu0 %591
          %595 = vset.pattern.permute.xlu0 0
          %596 = vperm.xlu0 %595, %v588
          %v597 = vpop.permute.xlu0 %596
          %v599 = vmul.f32 %v585, %v592
          %v600 = vmul.f32 %v586, %v597
          %v601 = vld [vmem:[#allocation2] sm:$0xff]
          %v602 = vld [vmem:[#allocation2 + $0x8] sm:$0xff]
          %v603 = vpack.c.bf16 %v600, %v599
          %v604 = vld [vmem:[%s403] sm:$0xf]
          %v605 = vld [vmem:[%s403 + $0x4] sm:$0xf]
          %v606 = vld [vmem:[%s403 + $0x8] sm:$0xf]
          %v607 = vld [vmem:[%s403 + $0xc] sm:$0xf]
          %v608 = vld [vmem:[%s403 + $0x10] sm:$0xf]
          %v609 = vld [vmem:[%s403 + $0x14] sm:$0xf]
          %v610 = vld [vmem:[%s403 + $0x18] sm:$0xf]
          %v611 = vld [vmem:[%s403 + $0x1c] sm:$0xf]
          %v612 = vld [vmem:[%s403 + $0x20] sm:$0xf]
          %v613 = vld [vmem:[%s403 + $0x24] sm:$0xf]
          %v614 = vld [vmem:[%s403 + $0x28] sm:$0xf]
          %v615 = vld [vmem:[%s403 + $0x2c] sm:$0xf]
          %v616 = vld [vmem:[%s403 + $0x30] sm:$0xf]
          %v617 = vld [vmem:[%s403 + $0x34] sm:$0xf]
          %v618 = vld [vmem:[%s403 + $0x38] sm:$0xf]
          %v619 = vld [vmem:[%s403 + $0x3c] sm:$0xf]
          %v636 = vunpack.c.l.b16 %v604
          %v637 = vunpack.c.l.b16 %v605
          %v638 = vunpack.c.l.b16 %v606
          %v639 = vunpack.c.l.b16 %v607
          %v640 = vunpack.c.l.b16 %v608
          %v641 = vunpack.c.l.b16 %v609
          %v642 = vunpack.c.l.b16 %v610
          %v643 = vunpack.c.l.b16 %v611
          %v644 = vunpack.c.l.b16 %v612
          %v645 = vunpack.c.l.b16 %v613
          %v646 = vunpack.c.l.b16 %v614
          %v647 = vunpack.c.l.b16 %v615
          %v648 = vunpack.c.l.b16 %v616
          %v649 = vunpack.c.l.b16 %v617
          %v650 = vunpack.c.l.b16 %v618
          %v651 = vunpack.c.l.b16 %v619
          %v652 = vpack.c.b16 %v637, %v636
          %v653 = vpack.c.b16 %v639, %v638
          %v654 = vpack.c.b16 %v641, %v640
          %v655 = vpack.c.b16 %v643, %v642
          %v656 = vpack.c.b16 %v645, %v644
          %v657 = vpack.c.b16 %v647, %v646
          %v658 = vpack.c.b16 %v649, %v648
          %v659 = vpack.c.b16 %v651, %v650
          %668 = vmatprep.subr.bf16.mxu0 0
          %669 = vmatpush1.bf16.msra.mxu0 %v659
          %670 = vmatprep.subr.bf16.mxu0 0
          %671 = vmatpush1.bf16.msra.mxu0 %v658
          %672 = vmatprep.subr.bf16.mxu0 0
          %673 = vmatpush1.bf16.msra.mxu0 %v657
          %674 = vmatprep.subr.bf16.mxu0 0
          %675 = vmatpush1.bf16.msra.mxu0 %v656
          %676 = vmatprep.subr.bf16.mxu0 0
          %677 = vmatpush1.bf16.msra.mxu0 %v655
          %678 = vmatprep.subr.bf16.mxu0 0
          %679 = vmatpush1.bf16.msra.mxu0 %v654
          %680 = vmatprep.subr.bf16.mxu0 0
          %681 = vmatpush1.bf16.msra.mxu0 %v653
          %682 = vmatprep.subr.bf16.mxu0 0
          %683 = vmatpush1.bf16.msra.mxu0 %v652
          %684 = vmatprep.subr.bf16.mxu0 0
          %685 = vmatpush2.bf16.msra.mxu0 0
          %686 = vmatprep.subr.bf16.mxu0 0
          %687 = vmatpush2.bf16.msra.mxu0 0
          %688 = vmatprep.subr.bf16.mxu0 0
          %689 = vmatpush2.bf16.msra.mxu0 0
          %690 = vmatprep.subr.bf16.mxu0 0
          %691 = vmatpush2.bf16.msra.mxu0 0
          %692 = vmatprep.subr.bf16.mxu0 0
          %693 = vmatpush2.bf16.msra.mxu0 0
          %694 = vmatprep.subr.bf16.mxu0 0
          %695 = vmatpush2.bf16.msra.mxu0 0
          %696 = vmatprep.subr.bf16.mxu0 0
          %697 = vmatpush2.bf16.msra.mxu0 0
          %698 = vmatprep.subr.bf16.mxu0 0
          %699 = vmatpush2.bf16.msra.mxu0 0
          %700 = vmatprep.mubr.bf16.mxu0 0
          %701 = vmatmul.mubr.bf16.gmra.mxu0 %v603
          %v702 = vpop.f32.mrf.mxu0
          %v703 = vadd.f32 0.0, %v702
          %v704 = vpop.f32.mrf.mxu0
          %v705 = vpop.f32.mrf.mxu0
          %v706 = vadd.f32 0.0, %v705
          %v707 = vpop.f32.mrf.mxu0
          %708 = vdwg.mxu0
          %v709 = vadd.f32 %v601, %v703
          %v710 = vadd.f32 %v602, %v706
          %711 = vst [vmem:[#allocation2] sm:$0xff] %v709
          %712 = vst [vmem:[#allocation2 + $0x8] sm:$0xff] %v710
          %p713 = scmp.eq.s32.totalorder %s29, 1
          // Predicated region
          $region83: #{sparse_moe_forward.1} parent=77 // pred_check
            %p714 = pneg %p713
          $region84: #{sparse_moe_forward.1} parent=77 // pred_check_branch
            %716 = sbr.rel (%p714) target = $region86
          $region85: #{sparse_moe_forward.1} parent=77 // pred_region
            %v717 = vld [vmem:[#allocation2] sm:$0xff]
            %v718 = vld [vmem:[#allocation2 + $0x8] sm:$0xff]
            %719 = vst [vmem:[%s410] sm:$0xff] %v717
            %720 = vst [vmem:[%s410 + $0x8] sm:$0xff] %v718
          $region86: #{sparse_moe_forward.1} parent=77 // pred_fallthru
            _
        $region78: #{sparse_moe_forward.1} parent=69 // pred_fallthru
          _
        %s721 = smul.u32 2, %s28
        %p722 = scmp.lt.s32.totalorder %s721, 15
        %s723 = scalar_select %p722, %s721, 15
        %s724 = smul.addr %s723, 8
        %s725 = scalar_lea.vmem %s6, %s724
        // Predicated region
        $region87: #{sparse_moe_forward.1} parent=69 // pred_check
          %p726 = pneg %p166
        $region88: #{sparse_moe_forward.1} parent=69 // pred_check_branch
          %728 = sbr.rel (%p726) target = $region90
        $region89: #{sparse_moe_forward.1} parent=69 // pred_region
          %s729 = smul.u32 2, %s28
        $region90: #{sparse_moe_forward.1} parent=69 // pred_fallthru
          _
      $region70: #{sparse_moe_forward.1} parent=5 // pred_fallthru
        _
      %p730 = scmp.le.s32.totalorder 2, %s19
      // Predicated region
      $region91: #{sparse_moe_forward.1} parent=5 // pred_check
        %p731 = pneg %p730
      $region92: #{sparse_moe_forward.1} parent=5 // pred_check_branch
        %733 = sbr.rel (%p731) target = $region94
      $region93: #{sparse_moe_forward.1} parent=5 // pred_region
        %s734 = ssub.s32 %s19, 2
        // Predicated region
        $region95: #{sparse_moe_forward.1} parent=93 // pred_check
          %p735 = pneg %p172
        $region96: #{sparse_moe_forward.1} parent=93 // pred_check_branch
          %737 = sbr.rel (%p735) target = $region98
        $region97: #{sparse_moe_forward.1} parent=93 // pred_region
          %s738 = smul.u32 2, %s30
          %p739 = scmp.lt.s32.totalorder %s738, 15
          %s740 = scalar_select %p739, %s738, 15
          %s741 = smul.addr %s740, 8
          %s742 = scalar_lea.vmem %s6, %s741
        $region98: #{sparse_moe_forward.1} parent=93 // pred_fallthru
          _
      $region94: #{sparse_moe_forward.1} parent=5 // pred_fallthru
        _
    $region6: #{sparse_moe_forward.1} parent=1 // loop_footer
      %s23 = sadd.s32 1, %s19
    $region7: #{sparse_moe_forward.1} parent=1 // loop_footer_branch
      %18 = sbr.rel target = $region3
    $region8: #{sparse_moe_forward.1} parent=1 // loop_exit
      _

</llo_original>
